<compile_context>
chip_gen: v7x
topology: tpu7x:2x2x1
jax: 0.10.0
libtpu: 0.0.40
codegen_flags: <defaults>
</compile_context>

<pallas_src>
import functools

import jax
import jax.numpy as jnp
from jax.experimental import pallas as pl
from jax.experimental.pallas import tpu as pltpu


def _round_up(x: int, m: int) -> int:
    return ((x + m - 1) // m) * m


def _foma_reconstruct_kernel(u_ref, s_ref, vtx_ref, vty_ref,
                             x_out_ref, y_out_ref, *, num_classes, matmul_dtype):
    # u_ref:   [tm, K_pad]    f32 batch tile (pipelined over the grid)
    # s_ref:   [1,  K_pad]    f32 lambda-scaled singular values (resident)
    # vtx_ref: [K_pad, D_pad] matmul dtype, VMEM-resident across batch tiles
    # vty_ref: [K_pad, C_pad] matmul dtype, VMEM-resident across batch tiles
    # Scale in f32 on the VPU, round to the MXU dtype exactly once.
    us = (u_ref[...] * s_ref[...]).astype(matmul_dtype)          # [tm, K_pad]

    # Two lane-dense MXU matmuls with f32 accumulation (no post-matmul slicing).
    x = jnp.dot(us, vtx_ref[...], preferred_element_type=jnp.float32)   # [tm, D_pad]
    zy = jnp.dot(us, vty_ref[...], preferred_element_type=jnp.float32)  # [tm, C_pad]

    # Label epilogue in f32 (padded label columns are exactly 0 -> no effect on sums).
    y = jnp.maximum(zy, 0.0)                                     # clamp(min=0)
    row_sum = jnp.sum(y, axis=1, keepdims=True)                  # [tm, 1]
    is_zero = row_sum == 0.0
    # Safe denominator (no inf/NaN lanes) + EUP reciprocal instead of a divide.
    inv = pl.reciprocal(row_sum + is_zero.astype(jnp.float32), approx=False)
    normalized = jnp.where(is_zero, jnp.float32(1.0 / num_classes), y * inv)

    x_out_ref[...] = x.astype(x_out_ref.dtype)
    y_out_ref[...] = normalized.astype(y_out_ref.dtype)


def foma_layer(X, Y, key, *, num_classes, alpha=1.0, rho=0.9,
               small_singular=True, apply_foma=True,
               matmul_dtype=jnp.bfloat16, batch_tile=256):
    """JAX/Pallas equivalent of FOMALayer.forward."""
    if not apply_foma:
        return X, Y

    B, D = X.shape
    C = num_classes
    if Y.ndim == 1:
        Y_onehot = jax.nn.one_hot(Y, C, dtype=jnp.float32)
    else:
        Y_onehot = Y.astype(jnp.float32)

    Z = jnp.concatenate([X.astype(jnp.float32), Y_onehot], axis=1)   # [B, D+C]

    # TODO(synk): SVD (iterative LAPACK-style routine) has no Pallas TPU
    # equivalent; it is computed with jnp.linalg.svd outside the kernel.
    U, s, Vt = jnp.linalg.svd(Z, full_matrices=False)
    K = int(s.shape[0])

    lam = jax.random.beta(key, alpha, alpha).astype(jnp.float32)      # Beta(alpha, alpha)
    cumperc = jnp.cumsum(s) / jnp.sum(s)
    condition = cumperc > rho if small_singular else cumperc < rho
    s_scaled = jnp.where(condition, s * lam, s)                       # [K]

    # ---- padding / tiling (lane-dense outputs, sublane-aligned K, batch grid) ----
    D_pad = _round_up(D, 128)
    C_pad = _round_up(C, 128)
    K_pad = _round_up(K, 8)
    tm = min(batch_tile, _round_up(B, 8))
    B_pad = _round_up(B, tm)
    grid = (B_pad // tm,)

    U_p = jnp.pad(U.astype(jnp.float32), ((0, B_pad - B), (0, K_pad - K)))    # [B_pad, K_pad]
    s_p = jnp.pad(s_scaled, (0, K_pad - K)).reshape(1, K_pad)                 # [1, K_pad] f32
    Vt_x = jnp.pad(Vt[:, :D].astype(matmul_dtype),
                   ((0, K_pad - K), (0, D_pad - D)))                          # [K_pad, D_pad]
    Vt_y = jnp.pad(Vt[:, D:].astype(matmul_dtype),
                   ((0, K_pad - K), (0, C_pad - C)))                          # [K_pad, C_pad]

    # VMEM budget: resident Vt halves + s, plus double-buffered U / output tiles.
    # TODO(synk): if K_pad*(D_pad+C_pad) ever exceeds ~half of v7x VMEM, tile D too.
    mbytes = jnp.dtype(matmul_dtype).itemsize
    out_bytes = jnp.dtype(X.dtype).itemsize
    resident_bytes = (K_pad * D_pad + K_pad * C_pad) * mbytes + K_pad * 4
    tile_bytes = tm * K_pad * 4 + tm * (D_pad + C_pad) * out_bytes
    vmem_est = resident_bytes + 2 * tile_bytes
    vmem_limit = int(min(max(vmem_est + (8 << 20), 32 << 20), 64 << 20))

    kernel = functools.partial(_foma_reconstruct_kernel,
                               num_classes=C, matmul_dtype=matmul_dtype)

    x_pad, y_pad = pl.pallas_call(
        kernel,
        out_shape=(jax.ShapeDtypeStruct((B_pad, D_pad), X.dtype),
                   jax.ShapeDtypeStruct((B_pad, C_pad), jnp.float32)),
        grid=grid,
        in_specs=[
            pl.BlockSpec((tm, K_pad), lambda i: (i, 0)),       # U tile (pipelined)
            pl.BlockSpec((1, K_pad), lambda i: (0, 0)),        # s (resident)
            pl.BlockSpec((K_pad, D_pad), lambda i: (0, 0)),    # Vt_x (resident)
            pl.BlockSpec((K_pad, C_pad), lambda i: (0, 0)),    # Vt_y (resident)
        ],
        out_specs=(
            pl.BlockSpec((tm, D_pad), lambda i: (i, 0)),
            pl.BlockSpec((tm, C_pad), lambda i: (i, 0)),
        ),
        compiler_params=pltpu.CompilerParams(
            dimension_semantics=("parallel",),
            vmem_limit_bytes=vmem_limit),
        cost_estimate=pl.CostEstimate(
            flops=2 * B_pad * K_pad * (D_pad + C_pad),
            transcendentals=B_pad,
            bytes_accessed=int(
                B_pad * K_pad * 4 + K_pad * 4
                + (K_pad * D_pad + K_pad * C_pad) * mbytes
                + B_pad * (D_pad + C_pad) * out_bytes)),
    )(U_p, s_p, Vt_x, Vt_y)

    return x_pad[:B, :D], y_pad[:B, :C]


if __name__ == "__main__":
    # Small shapes consistent with the module: flattened features [B, D], labels [B].
    B, D, C = 8, 32, 8
    key = jax.random.PRNGKey(0)
    kx, ky, kbeta = jax.random.split(key, 3)

    X = jax.random.normal(kx, (B, D), dtype=jnp.float32)
    Y = jax.random.randint(ky, (B,), 0, C, dtype=jnp.int32)

    X_scaled, Y_norm = foma_layer(X, Y, kbeta, num_classes=C,
                                  alpha=1.0, rho=0.9, small_singular=True)
    jax.block_until_ready((X_scaled, Y_norm))

    assert X_scaled.shape == (B, D) and Y_norm.shape == (B, C)
    assert bool(jnp.all(jnp.isfinite(X_scaled))) and bool(jnp.all(jnp.isfinite(Y_norm)))
    # Normalized label rows should sum to ~1 (either softly-normalized or uniform).
    assert bool(jnp.all(jnp.abs(jnp.sum(Y_norm, axis=1) - 1.0) < 1e-2))
    print("KERNEL_OK")
</pallas_src>

<mosaic_0001>
module attributes {stable_mosaic.version = 11 : i64} {
  func.func @_foma_reconstruct_kernel(%arg0: i32, %arg1: memref<8x8xf32, #tpu.memory_space<vmem>>, %arg2: memref<1x8xf32, #tpu.memory_space<vmem>>, %arg3: memref<8x128xbf16, #tpu.memory_space<vmem>>, %arg4: memref<8x128xbf16, #tpu.memory_space<vmem>>, %arg5: memref<8x128xf32, #tpu.memory_space<vmem>>, %arg6: memref<8x128xf32, #tpu.memory_space<vmem>>) attributes {dimension_semantics = [#tpu.dimension_semantics<parallel>], iteration_bounds = array<i64: 1>, scalar_prefetch = 0 : i64, scratch_operands = 0 : i64, tpu.core_type = #tpu.core_type<tc>, window_params = [{transform_indices = @transform_0, window_bounds = array<i64: 8, 8>}, {pipeline_mode = #tpu.pipeline_mode<synchronous>, transform_indices = @transform_1, window_bounds = array<i64: 1, 8>}, {pipeline_mode = #tpu.pipeline_mode<synchronous>, transform_indices = @transform_2, window_bounds = array<i64: 8, 128>}, {pipeline_mode = #tpu.pipeline_mode<synchronous>, transform_indices = @transform_3, window_bounds = array<i64: 8, 128>}, {transform_indices = @transform_4, window_bounds = array<i64: 8, 128>}, {transform_indices = @transform_5, window_bounds = array<i64: 8, 128>}]} {
    %c0 = arith.constant 0 : index
    %c0_0 = arith.constant 0 : index
    %0 = vector.load %arg1[%c0, %c0_0] : memref<8x8xf32, #tpu.memory_space<vmem>>, vector<8x8xf32>
    %c0_1 = arith.constant 0 : index
    %c0_2 = arith.constant 0 : index
    %1 = vector.load %arg2[%c0_1, %c0_2] : memref<1x8xf32, #tpu.memory_space<vmem>>, vector<1x8xf32>
    %2 = vector.broadcast %1 : vector<1x8xf32> to vector<8x8xf32>
    %3 = arith.mulf %0, %2 : vector<8x8xf32>
    %4 = arith.truncf %3 : vector<8x8xf32> to vector<8x8xbf16>
    %c0_3 = arith.constant 0 : index
    %c0_4 = arith.constant 0 : index
    %5 = vector.load %arg3[%c0_3, %c0_4] : memref<8x128xbf16, #tpu.memory_space<vmem>>, vector<8x128xbf16>
    %cst = arith.constant dense<0.000000e+00> : vector<8x128xf32>
    %6 = tpu.matmul %4, %5, %cst {dimension_numbers = #tpu.dot_dimension_numbers<[1], [0], [0], [1], [0, 0, 1, 1], [], []>} : vector<8x8xbf16>, vector<8x128xbf16>, vector<8x128xf32> -> vector<8x128xf32>
    %c0_5 = arith.constant 0 : index
    %c0_6 = arith.constant 0 : index
    %7 = vector.load %arg4[%c0_5, %c0_6] : memref<8x128xbf16, #tpu.memory_space<vmem>>, vector<8x128xbf16>
    %cst_7 = arith.constant dense<0.000000e+00> : vector<8x128xf32>
    %8 = tpu.matmul %4, %7, %cst_7 {dimension_numbers = #tpu.dot_dimension_numbers<[1], [0], [0], [1], [0, 0, 1, 1], [], []>} : vector<8x8xbf16>, vector<8x128xbf16>, vector<8x128xf32> -> vector<8x128xf32>
    %cst_8 = arith.constant 0.000000e+00 : f32
    %9 = vector.broadcast %cst_8 : f32 to vector<8x128xf32>
    %10 = arith.maximumf %8, %9 : vector<8x128xf32>
    %cst_9 = arith.constant dense<0.000000e+00> : vector<8xf32>
    %11 = vector.multi_reduction <add>, %10, %cst_9 [1] : vector<8x128xf32> to vector<8xf32>
    %12 = vector.shape_cast %11 : vector<8xf32> to vector<8x1xf32>
    %cst_10 = arith.constant 0.000000e+00 : f32
    %13 = vector.broadcast %cst_10 : f32 to vector<8x1xf32>
    %14 = arith.cmpf oeq, %12, %13 : vector<8x1xf32>
    %15 = arith.extui %14 : vector<8x1xi1> to vector<8x1xi32>
    %16 = arith.sitofp %15 : vector<8x1xi32> to vector<8x1xf32>
    %17 = arith.addf %12, %16 : vector<8x1xf32>
    %18 = tpu.reciprocal %17 : vector<8x1xf32> -> vector<8x1xf32>
    %19 = vector.broadcast %18 : vector<8x1xf32> to vector<8x128xf32>
    %20 = arith.mulf %10, %19 : vector<8x128xf32>
    %cst_11 = arith.constant 1.250000e-01 : f32
    %21 = vector.shape_cast %14 : vector<8x1xi1> to vector<8x1xi1>
    %22 = vector.broadcast %21 : vector<8x1xi1> to vector<8x128xi1>
    %23 = vector.broadcast %cst_11 : f32 to vector<8x128xf32>
    %24 = arith.select %22, %23, %20 : vector<8x128xi1>, vector<8x128xf32>
    %c0_12 = arith.constant 0 : index
    %c0_13 = arith.constant 0 : index
    %25 = vector.load %arg5[%c0_12, %c0_13] : memref<8x128xf32, #tpu.memory_space<vmem>>, vector<8x128xf32>
    tpu.vector_store %arg5[%c0_12, %c0_13], %6 {strides = array<i32>} : memref<8x128xf32, #tpu.memory_space<vmem>>, vector<8x128xf32>,
    %c0_14 = arith.constant 0 : index
    %c0_15 = arith.constant 0 : index
    %26 = vector.load %arg6[%c0_14, %c0_15] : memref<8x128xf32, #tpu.memory_space<vmem>>, vector<8x128xf32>
    tpu.vector_store %arg6[%c0_14, %c0_15], %24 {strides = array<i32>} : memref<8x128xf32, #tpu.memory_space<vmem>>, vector<8x128xf32>,
    return
  }
  func.func @transform_0(%arg0: i32) -> (i32, i32) {
    %c0_i32 = arith.constant 0 : i32
    %c0_i32_0 = arith.constant 0 : i32
    return %arg0, %c0_i32 : i32, i32
  }
  func.func @transform_1(%arg0: i32) -> (i32, i32) {
    %c0_i32 = arith.constant 0 : i32
    %c0_i32_0 = arith.constant 0 : i32
    %c0_i32_1 = arith.constant 0 : i32
    return %c0_i32, %c0_i32_0 : i32, i32
  }
  func.func @transform_2(%arg0: i32) -> (i32, i32) {
    %c0_i32 = arith.constant 0 : i32
    %c0_i32_0 = arith.constant 0 : i32
    %c0_i32_1 = arith.constant 0 : i32
    return %c0_i32, %c0_i32_0 : i32, i32
  }
  func.func @transform_3(%arg0: i32) -> (i32, i32) {
    %c0_i32 = arith.constant 0 : i32
    %c0_i32_0 = arith.constant 0 : i32
    %c0_i32_1 = arith.constant 0 : i32
    return %c0_i32, %c0_i32_0 : i32, i32
  }
  func.func @transform_4(%arg0: i32) -> (i32, i32) {
    %c0_i32 = arith.constant 0 : i32
    %c0_i32_0 = arith.constant 0 : i32
    return %arg0, %c0_i32 : i32, i32
  }
  func.func @transform_5(%arg0: i32) -> (i32, i32) {
    %c0_i32 = arith.constant 0 : i32
    %c0_i32_0 = arith.constant 0 : i32
    return %arg0, %c0_i32 : i32, i32
  }
}

</mosaic_0001>

<llo_original>
// kernel: tpu_custom_call.1
$region0: #{tpu_custom_call.1}
  #allocation0 [shape = 'u32[]', space=smem, size = 0x4, offset = 0x4, fixed_abs, tag = 'smem constant byte address 0x4 - core index']
  #allocation1 [shape = 'u32[144,128]{1,0:T(1,128)}', space=vmem, size = 0x12000, scoped, tag = 'internal scratch']
  %s0 = inlined_call_operand.hbm [shape: f32[8,8], index: 0, kind: input, shape index: {}]
  %s1 = inlined_call_operand.vmem [shape: f32[1,8], index: 1, kind: input, shape index: {}]
  %s2 = inlined_call_operand.vmem [shape: bf16[8,128], index: 2, kind: input, shape index: {}]
  %s3 = inlined_call_operand.vmem [shape: bf16[8,128], index: 3, kind: input, shape index: {}]
  %s4 = inlined_call_operand.hbm [shape: f32[8,128], index: 4, kind: output, shape index: {0}]
  %s5 = inlined_call_operand.hbm [shape: f32[8,128], index: 5, kind: output, shape index: {1}]
  %6 = xla_tuple %s4, %s5
  %s7 = sld [smem:[#allocation0]]
  $region38: #{tpu_custom_call.1} parent=0
    _
  %s9 = ssub.s32 1, %s7
  %s10 = scalar_select 0, %s9, %s7
  $region1: #{tpu_custom_call.1} parent=0
    #allocation2 [shape = 'u8[4096]{0}', space=vmem, size = 0x1000, scoped, tag = 'input window, operand 0, single buffered']
    #allocation3 [shape = 's32[1]{0}', space=sflag, size = 0x4, scoped, tag = 'scoped memory for tpu_custom_call.1']
    #allocation4 [shape = 's32[1]{0}', space=sflag, size = 0x4, scoped, tag = 'scoped memory for tpu_custom_call.1']
    #allocation5 [shape = 'u8[4096]{0}', space=vmem, size = 0x1000, scoped, tag = 'output window, operand 0, single buffered']
    #allocation6 [shape = 'u8[4096]{0}', space=vmem, size = 0x1000, scoped, tag = 'output window, operand 1, single buffered']
    #allocation7 [shape = 's32[1]{0}', space=sflag, size = 0x4, scoped, tag = 'scoped memory for tpu_custom_call.1']
    %11 = vsyncpa [#allocation3], 0
    %12 = vsyncpa [#allocation4], 0
    %13 = vsyncpa [#allocation7], 0
    // Predicated region
    $region2: #{tpu_custom_call.1} parent=1 // pred_check
      _
    $region3: #{tpu_custom_call.1} parent=1 // pred_check_branch
      %15 = sbr.rel (0) target = $region5
    $region4: #{tpu_custom_call.1} parent=1 // pred_region
      %s17 = ssub.s32 128, 128
      %18 = vsyncadd [#allocation3], %s17
      %s20 = sshll.u32 [#allocation2], 4
      %s21 = int_to_ptr.vmem [resolvable:$true] %s20
      %23 = dma.hbm_to_vmem [thread:$0]  %s0, 128, %s21, [#allocation3]
    $region5: #{tpu_custom_call.1} parent=1 // pred_fallthru
      _
    // Predicated region
    $region6: #{tpu_custom_call.1} parent=1 // pred_check
      _
    $region7: #{tpu_custom_call.1} parent=1 // pred_check_branch
      %25 = sbr.rel (0) target = $region9
    $region8: #{tpu_custom_call.1} parent=1 // pred_region
      _
    $region9: #{tpu_custom_call.1} parent=1 // pred_fallthru
      _
    // Predicated region
    $region10: #{tpu_custom_call.1} parent=1 // pred_check
      _
    $region11: #{tpu_custom_call.1} parent=1 // pred_check_branch
      %27 = sbr.rel (0) target = $region13
    $region12: #{tpu_custom_call.1} parent=1 // pred_region
      _
    $region13: #{tpu_custom_call.1} parent=1 // pred_fallthru
      _
    // Predicated region
    $region14: #{tpu_custom_call.1} parent=1 // pred_check
      _
    $region15: #{tpu_custom_call.1} parent=1 // pred_check_branch
      %29 = sbr.rel (0) target = $region17
    $region16: #{tpu_custom_call.1} parent=1 // pred_region
      _
    $region17: #{tpu_custom_call.1} parent=1 // pred_fallthru
      _
    // Predicated region
    $region18: #{tpu_custom_call.1} parent=1 // pred_check
      _
    $region19: #{tpu_custom_call.1} parent=1 // pred_check_branch
      %31 = sbr.rel (0) target = $region21
    $region20: #{tpu_custom_call.1} parent=1 // pred_region
      %32 = dma.done [#allocation3], 128
    $region21: #{tpu_custom_call.1} parent=1 // pred_fallthru
      _
    %v34 = vld [vmem:[#allocation2] sm:$0xff]
    %v35 = vld [vmem:[%s1] sm:$0x1]
    %v37 = vlaneseq
    %v38 = vshrl.u32 %v37, 7
    %v39 = vsub.s32 0, %v38
    %v40 = vrot.slane %v35, %v39
    %v42 = vmul.f32 %v34, %v40
    %v43 = vpack.c.bf16 %v42, %v42
    %v44 = vld [vmem:[%s2] sm:$0xf]
    %vm45 = vcmask 64512
    %v47 = vsel %vm45, %v43, 0
    %vm49 = vcmask 1043456
    %v51 = vsel %vm49, %v44, 0
    %53 = vmatprep.subr.bf16.mxu0 0
    %54 = vmatpush1.bf16.msra.mxu0 %v51
    %55 = vmatprep.subr.bf16.mxu0 0
    %56 = vmatpush1.bf16.msra.mxu0 0
    %57 = vmatprep.subr.bf16.mxu0 0
    %58 = vmatpush1.bf16.msra.mxu0 0
    %59 = vmatprep.subr.bf16.mxu0 0
    %60 = vmatpush1.bf16.msra.mxu0 0
    %61 = vmatprep.subr.bf16.mxu0 0
    %62 = vmatpush1.bf16.msra.mxu0 0
    %63 = vmatprep.subr.bf16.mxu0 0
    %64 = vmatpush1.bf16.msra.mxu0 0
    %65 = vmatprep.subr.bf16.mxu0 0
    %66 = vmatpush1.bf16.msra.mxu0 0
    %67 = vmatprep.subr.bf16.mxu0 0
    %68 = vmatpush1.bf16.msra.mxu0 0
    %69 = vmatprep.subr.bf16.mxu0 0
    %70 = vmatpush1.bf16.msra.mxu0 0
    %71 = vmatprep.subr.bf16.mxu0 0
    %72 = vmatpush1.bf16.msra.mxu0 0
    %73 = vmatprep.subr.bf16.mxu0 0
    %74 = vmatpush1.bf16.msra.mxu0 0
    %75 = vmatprep.subr.bf16.mxu0 0
    %76 = vmatpush1.bf16.msra.mxu0 0
    %77 = vmatprep.subr.bf16.mxu0 0
    %78 = vmatpush1.bf16.msra.mxu0 0
    %79 = vmatprep.subr.bf16.mxu0 0
    %80 = vmatpush1.bf16.msra.mxu0 0
    %81 = vmatprep.subr.bf16.mxu0 0
    %82 = vmatpush1.bf16.msra.mxu0 0
    %83 = vmatprep.subr.bf16.mxu0 0
    %84 = vmatpush1.bf16.msra.mxu0 0
    %85 = vmatprep.mubr.bf16.mxu0 0
    %86 = vmatmul.mubr.bf16.gmra.mrb[0].mxu0 %v47
    %v87 = vpop.f32.mrb[0].mxu0
    %v88 = vadd.f32 0.0, %v87
    %v89 = vpop.f32.mrb[0].mxu0
    %v90 = vpop.f32.mrb[0].mxu0
    %v91 = vpop.f32.mrb[0].mxu0
    %92 = vdwg.mxu0
    %v93 = vld [vmem:[%s3] sm:$0xf]
    %v95 = vsel %vm49, %v93, 0
    %97 = vmatprep.subr.bf16.mxu0 0
    %98 = vmatpush1.bf16.msra.mxu0 %v95
    %99 = vmatprep.subr.bf16.mxu0 0
    %100 = vmatpush1.bf16.msra.mxu0 0
    %101 = vmatprep.subr.bf16.mxu0 0
    %102 = vmatpush1.bf16.msra.mxu0 0
    %103 = vmatprep.subr.bf16.mxu0 0
    %104 = vmatpush1.bf16.msra.mxu0 0
    %105 = vmatprep.subr.bf16.mxu0 0
    %106 = vmatpush1.bf16.msra.mxu0 0
    %107 = vmatprep.subr.bf16.mxu0 0
    %108 = vmatpush1.bf16.msra.mxu0 0
    %109 = vmatprep.subr.bf16.mxu0 0
    %110 = vmatpush1.bf16.msra.mxu0 0
    %111 = vmatprep.subr.bf16.mxu0 0
    %112 = vmatpush1.bf16.msra.mxu0 0
    %113 = vmatprep.subr.bf16.mxu0 0
    %114 = vmatpush1.bf16.msra.mxu0 0
    %115 = vmatprep.subr.bf16.mxu0 0
    %116 = vmatpush1.bf16.msra.mxu0 0
    %117 = vmatprep.subr.bf16.mxu0 0
    %118 = vmatpush1.bf16.msra.mxu0 0
    %119 = vmatprep.subr.bf16.mxu0 0
    %120 = vmatpush1.bf16.msra.mxu0 0
    %121 = vmatprep.subr.bf16.mxu0 0
    %122 = vmatpush1.bf16.msra.mxu0 0
    %123 = vmatprep.subr.bf16.mxu0 0
    %124 = vmatpush1.bf16.msra.mxu0 0
    %125 = vmatprep.subr.bf16.mxu0 0
    %126 = vmatpush1.bf16.msra.mxu0 0
    %127 = vmatprep.subr.bf16.mxu0 0
    %128 = vmatpush1.bf16.msra.mxu0 0
    %129 = vmatprep.mubr.bf16.mxu0 0
    %130 = vmatmul.mubr.bf16.gmra.mrb[0].mxu0 %v47
    %v131 = vpop.f32.mrb[0].mxu0
    %v132 = vadd.f32 0.0, %v131
    %v133 = vpop.f32.mrb[0].mxu0
    %v134 = vpop.f32.mrb[0].mxu0
    %v135 = vpop.f32.mrb[0].mxu0
    %136 = vdwg.mxu0
    %v137 = vmax.f32 %v132, 0.0
    %138 = vadd.xlane.f32.xlu0 %v137
    %v139 = vpop.xlane.xlu0 %138
    %vm140 = vcmp.eq.f32.partialorder %v139, 0.0
    %v141 = vsel %vm140, 1, 0
    %v142 = vcvt.s32.f32 %v141
    %v143 = vadd.f32 %v139, %v142
    %v144 = vrcp.pop %v143
    %v145 = vmul.f32 %v137, %v144
    %vm146 = vcmp.eq.s32.totalorder %v141, 1
    %v147 = vsel %vm146, 0.125, %v145
    %148 = vst [vmem:[#allocation5] sm:$0xff] %v88
    %149 = vst [vmem:[#allocation6] sm:$0xff] %v147
    // Predicated region
    $region22: #{tpu_custom_call.1} parent=1 // pred_check
      _
    $region23: #{tpu_custom_call.1} parent=1 // pred_check_branch
      %151 = sbr.rel (0) target = $region25
    $region24: #{tpu_custom_call.1} parent=1 // pred_region
      %s153 = ssub.s32 128, 128
      %154 = vsyncadd [#allocation4], %s153
      %s156 = sshll.u32 [#allocation5], 4
      %s157 = int_to_ptr.vmem [resolvable:$true] %s156
      %159 = dma.vmem_to_hbm [thread:$0]  %s157, 128, %s4, [#allocation4]
    $region25: #{tpu_custom_call.1} parent=1 // pred_fallthru
      _
    // Predicated region
    $region26: #{tpu_custom_call.1} parent=1 // pred_check
      _
    $region27: #{tpu_custom_call.1} parent=1 // pred_check_branch
      %161 = sbr.rel (0) target = $region29
    $region28: #{tpu_custom_call.1} parent=1 // pred_region
      %s163 = ssub.s32 128, 128
      %164 = vsyncadd [#allocation7], %s163
      %s166 = sshll.u32 [#allocation6], 4
      %s167 = int_to_ptr.vmem [resolvable:$true] %s166
      %169 = dma.vmem_to_hbm [thread:$0]  %s167, 128, %s5, [#allocation7]
    $region29: #{tpu_custom_call.1} parent=1 // pred_fallthru
      _
    // Predicated region
    $region30: #{tpu_custom_call.1} parent=1 // pred_check
      _
    $region31: #{tpu_custom_call.1} parent=1 // pred_check_branch
      %171 = sbr.rel (0) target = $region33
    $region32: #{tpu_custom_call.1} parent=1 // pred_region
      %172 = dma.done [#allocation4], 128
    $region33: #{tpu_custom_call.1} parent=1 // pred_fallthru
      _
    // Predicated region
    $region34: #{tpu_custom_call.1} parent=1 // pred_check
      _
    $region35: #{tpu_custom_call.1} parent=1 // pred_check_branch
      %174 = sbr.rel (0) target = $region37
    $region36: #{tpu_custom_call.1} parent=1 // pred_region
      %175 = dma.done [#allocation7], 128
    $region37: #{tpu_custom_call.1} parent=1 // pred_fallthru
      _
    %176 = vsyncpa [#allocation3], 1
    %177 = vsyncpa [#allocation4], 1
    %178 = vsyncpa [#allocation7], 1

</llo_original>
